<compile_context>
chip_gen: v7x
topology: tpu7x:2x2x1
jax: 0.10.0
libtpu: 0.0.40
codegen_flags: <defaults>
</compile_context>

<pallas_src>
import jax
import jax.numpy as jnp
from jax.experimental import pallas as pl
from jax.experimental.pallas import tpu as pltpu


def _attention3d_kernel(x_ref, w1s_ref, b1_ref, w2_ref, b2_ref, out_ref, acc_ref):
    # x_ref  : (TB, C, TS)  spatial tile of the input, native dtype
    # w1s_ref: (C, K)       fc1 weight, transposed AND pre-scaled by 1/S, f32
    # b1_ref : (1, K)       f32
    # w2_ref : (K, K)       fc2 weight, transposed, f32
    # b2_ref : (1, K)       f32
    # out_ref: (TB, K)
    # acc_ref: (TB, C)      f32 running spatial sum (VMEM scratch)
    s_step = pl.program_id(1)

    @pl.when(s_step == 0)
    def _init():
        acc_ref[...] = jnp.zeros_like(acc_ref)

    # Per-tile partial sum over the spatial (lane) axis; promote to f32 only
    # inside the reduction (no whole-block cast).
    acc_ref[...] += jnp.sum(x_ref[...], axis=-1, dtype=jnp.float32)

    @pl.when(s_step == pl.num_programs(1) - 1)
    def _epilogue():
        pooled_sum = acc_ref[...]                                   # (TB, C) raw sums
        # fc1 (1x1x1 Conv3d == dense); 1/S mean scale is folded into w1s.
        h = jnp.dot(pooled_sum, w1s_ref[...],
                    preferred_element_type=jnp.float32) + b1_ref[...]
        h = jnp.maximum(h, 0.0)
        # fc2 (1x1x1 Conv3d == dense)
        logits = jnp.dot(h, w2_ref[...],
                         preferred_element_type=jnp.float32) + b2_ref[...]
        # softmax over K (dim=1), numerically stable
        m = jnp.max(logits, axis=1, keepdims=True)
        e = jnp.exp(logits - m)
        denom = jnp.sum(e, axis=1, keepdims=True)
        out_ref[...] = (e / denom).astype(out_ref.dtype)


def attention3d_forward(x_ncdhw, w1, b1, w2, b2, *, s_tile=512, b_tile=None):
    """x_ncdhw: (B, C, D, H, W); w1: (K, C); b1: (K,); w2: (K, K); b2: (K,)."""
    B, C, D, H, W = x_ncdhw.shape
    K = w1.shape[0]
    S = D * H * W

    # Layout: (B, C, S) — flattened spatial last => lane axis.
    x_flat = x_ncdhw.reshape(B, C, S)

    # ----- tile sizing ------------------------------------------------------
    # Spatial tile: multiple of 128 lanes, capped at s_tile; pad S with zeros
    # (zeros do not change the sum; the 1/S divisor uses the true S).
    TS = min(s_tile, pl.cdiv(S, 128) * 128)
    S_pad = pl.cdiv(S, TS) * TS
    # Batch tile: small row block; pad B with zeros and slice the result.
    if b_tile is None:
        b_tile = B if B <= 8 else 8
    TB = b_tile
    B_pad = pl.cdiv(B, TB) * TB

    if S_pad != S or B_pad != B:
        x_flat = jnp.pad(x_flat, ((0, B_pad - B), (0, 0), (0, S_pad - S)))

    # ----- parameters: fold mean scale into fc1 weight ----------------------
    w1s = (jnp.transpose(w1).astype(jnp.float32)) * (1.0 / S)   # (C, K)
    w2_t = jnp.transpose(w2).astype(jnp.float32)                # (K, K)
    b1_r = b1.reshape(1, K).astype(jnp.float32)
    b2_r = b2.reshape(1, K).astype(jnp.float32)

    grid = (B_pad // TB, S_pad // TS)

    itemsize = jnp.dtype(x_ncdhw.dtype).itemsize
    cost = pl.CostEstimate(
        flops=int(B_pad * C * S_pad + 2 * B_pad * (C * K + K * K)),
        transcendentals=int(B_pad * K),
        bytes_accessed=int(B_pad * C * S_pad * itemsize
                           + (C * K + K * K + 2 * K) * 4
                           + B_pad * K * itemsize),
    )

    out_padded = pl.pallas_call(
        _attention3d_kernel,
        out_shape=jax.ShapeDtypeStruct((B_pad, K), x_ncdhw.dtype),
        grid_spec=pltpu.PrefetchScalarGridSpec(
            num_scalar_prefetch=0,
            grid=grid,
            in_specs=[
                pl.BlockSpec((TB, C, TS), lambda b, s: (b, 0, s)),
                pl.BlockSpec((C, K), lambda b, s: (0, 0)),
                pl.BlockSpec((1, K), lambda b, s: (0, 0)),
                pl.BlockSpec((K, K), lambda b, s: (0, 0)),
                pl.BlockSpec((1, K), lambda b, s: (0, 0)),
            ],
            out_specs=pl.BlockSpec((TB, K), lambda b, s: (b, 0)),
            scratch_shapes=[pltpu.VMEM((TB, C), jnp.float32)],
        ),
        compiler_params=pltpu.CompilerParams(
            dimension_semantics=("parallel", "arbitrary"),
        ),
        cost_estimate=cost,
    )(x_flat, w1s, b1_r, w2_t, b2_r)

    return out_padded[:B]


def _reference(x_ncdhw, w1, b1, w2, b2):
    B, C, D, H, W = x_ncdhw.shape
    pooled = jnp.mean(x_ncdhw.reshape(B, C, -1), axis=2)
    h = jnp.maximum(pooled @ w1.T + b1, 0.0)
    logits = h @ w2.T + b2
    return jax.nn.softmax(logits, axis=1)


if __name__ == "__main__":
    # Small, module-consistent shapes: in_planes=4, K=8, spatial = 4x8x8
    B, C, K = 2, 4, 8
    D, H, W = 4, 8, 8

    key = jax.random.PRNGKey(0)
    kx, k1, k2, k3, k4 = jax.random.split(key, 5)
    x = jax.random.normal(kx, (B, C, D, H, W), dtype=jnp.float32)
    # Deterministic "Conv3d" parameters (1x1x1 kernels -> dense matrices)
    w1 = jax.random.normal(k1, (K, C), dtype=jnp.float32) * 0.1   # fc1.weight (K,C,1,1,1)
    b1 = jax.random.normal(k2, (K,), dtype=jnp.float32) * 0.1     # fc1.bias
    w2 = jax.random.normal(k3, (K, K), dtype=jnp.float32) * 0.1   # fc2.weight (K,K,1,1,1)
    b2 = jax.random.normal(k4, (K,), dtype=jnp.float32) * 0.1     # fc2.bias

    # Use a 128-lane spatial tile so the multi-step accumulation path
    # (S = 256 -> 2 grid steps over the reduction axis) is exercised.
    out = attention3d_forward(x, w1, b1, w2, b2, s_tile=128)
    out = jax.block_until_ready(out)

    ref = _reference(x, w1, b1, w2, b2)
    assert out.shape == (B, K)
    assert jnp.allclose(out, ref, atol=1e-5, rtol=1e-5), "mismatch vs reference"
    assert jnp.allclose(jnp.sum(out, axis=1), 1.0, atol=1e-5), "softmax rows must sum to 1"

    print("KERNEL_OK")
</pallas_src>

<mosaic_0001>
module attributes {stable_mosaic.version = 11 : i64} {
  func.func @_attention3d_kernel(%arg0: i32, %arg1: i32, %arg2: memref<2x4x128xf32, #tpu.memory_space<vmem>>, %arg3: memref<4x8xf32, #tpu.memory_space<vmem>>, %arg4: memref<1x8xf32, #tpu.memory_space<vmem>>, %arg5: memref<8x8xf32, #tpu.memory_space<vmem>>, %arg6: memref<1x8xf32, #tpu.memory_space<vmem>>, %arg7: memref<2x8xf32, #tpu.memory_space<vmem>>, %arg8: memref<2x4xf32, #tpu.memory_space<vmem>>) attributes {dimension_semantics = [#tpu.dimension_semantics<parallel>, #tpu.dimension_semantics<arbitrary>], iteration_bounds = array<i64: 1, 2>, scalar_prefetch = 0 : i64, scratch_operands = 1 : i64, tpu.core_type = #tpu.core_type<tc>, window_params = [{transform_indices = @transform_0, window_bounds = array<i64: 2, 4, 128>}, {pipeline_mode = #tpu.pipeline_mode<synchronous>, transform_indices = @transform_1, window_bounds = array<i64: 4, 8>}, {pipeline_mode = #tpu.pipeline_mode<synchronous>, transform_indices = @transform_2, window_bounds = array<i64: 1, 8>}, {pipeline_mode = #tpu.pipeline_mode<synchronous>, transform_indices = @transform_3, window_bounds = array<i64: 8, 8>}, {pipeline_mode = #tpu.pipeline_mode<synchronous>, transform_indices = @transform_4, window_bounds = array<i64: 1, 8>}, {transform_indices = @transform_5, window_bounds = array<i64: 2, 8>}]} {
    %c0_i32 = arith.constant 0 : i32
    %0 = arith.cmpi eq, %arg1, %c0_i32 : i32
    %1 = arith.extui %0 : i1 to i32
    %c0_i32_0 = arith.constant 0 : i32
    %2 = arith.cmpi ne, %1, %c0_i32_0 : i32
    scf.if %2 {
      %cst_8 = arith.constant 0.000000e+00 : f32
      %11 = vector.broadcast %cst_8 : f32 to vector<2x4xf32>
      %c0_9 = arith.constant 0 : index
      %c0_10 = arith.constant 0 : index
      %12 = vector.load %arg8[%c0_9, %c0_10] : memref<2x4xf32, #tpu.memory_space<vmem>>, vector<2x4xf32>
      tpu.vector_store %arg8[%c0_9, %c0_10], %11 {strides = array<i32>} : memref<2x4xf32, #tpu.memory_space<vmem>>, vector<2x4xf32>,
    } else {
    }
    %c0 = arith.constant 0 : index
    %c0_1 = arith.constant 0 : index
    %3 = vector.load %arg8[%c0, %c0_1] : memref<2x4xf32, #tpu.memory_space<vmem>>, vector<2x4xf32>
    %c0_2 = arith.constant 0 : index
    %c0_3 = arith.constant 0 : index
    %c0_4 = arith.constant 0 : index
    %4 = vector.load %arg2[%c0_2, %c0_3, %c0_4] : memref<2x4x128xf32, #tpu.memory_space<vmem>>, vector<2x4x128xf32>
    %cst = arith.constant dense<0.000000e+00> : vector<2x4xf32>
    %5 = vector.multi_reduction <add>, %4, %cst [2] : vector<2x4x128xf32> to vector<2x4xf32>
    %6 = arith.addf %3, %5 : vector<2x4xf32>
    %c0_5 = arith.constant 0 : index
    %c0_6 = arith.constant 0 : index
    %7 = vector.load %arg8[%c0_5, %c0_6] : memref<2x4xf32, #tpu.memory_space<vmem>>, vector<2x4xf32>
    tpu.vector_store %arg8[%c0_5, %c0_6], %6 {strides = array<i32>} : memref<2x4xf32, #tpu.memory_space<vmem>>, vector<2x4xf32>,
    %c1_i32 = arith.constant 1 : i32
    %8 = arith.cmpi eq, %arg1, %c1_i32 : i32
    %9 = arith.extui %8 : i1 to i32
    %c0_i32_7 = arith.constant 0 : i32
    %10 = arith.cmpi ne, %9, %c0_i32_7 : i32
    scf.if %10 {
      %c0_8 = arith.constant 0 : index
      %c0_9 = arith.constant 0 : index
      %11 = vector.load %arg8[%c0_8, %c0_9] : memref<2x4xf32, #tpu.memory_space<vmem>>, vector<2x4xf32>
      %c0_10 = arith.constant 0 : index
      %c0_11 = arith.constant 0 : index
      %12 = vector.load %arg3[%c0_10, %c0_11] : memref<4x8xf32, #tpu.memory_space<vmem>>, vector<4x8xf32>
      %cst_12 = arith.constant dense<0.000000e+00> : vector<2x8xf32>
      %13 = tpu.matmul %11, %12, %cst_12 {dimension_numbers = #tpu.dot_dimension_numbers<[1], [0], [0], [1], [0, 0, 1, 1], [], []>} : vector<2x4xf32>, vector<4x8xf32>, vector<2x8xf32> -> vector<2x8xf32>
      %c0_13 = arith.constant 0 : index
      %c0_14 = arith.constant 0 : index
      %14 = vector.load %arg4[%c0_13, %c0_14] : memref<1x8xf32, #tpu.memory_space<vmem>>, vector<1x8xf32>
      %15 = vector.broadcast %14 : vector<1x8xf32> to vector<2x8xf32>
      %16 = arith.addf %13, %15 : vector<2x8xf32>
      %cst_15 = arith.constant 0.000000e+00 : f32
      %17 = vector.broadcast %cst_15 : f32 to vector<2x8xf32>
      %18 = arith.maximumf %16, %17 : vector<2x8xf32>
      %c0_16 = arith.constant 0 : index
      %c0_17 = arith.constant 0 : index
      %19 = vector.load %arg5[%c0_16, %c0_17] : memref<8x8xf32, #tpu.memory_space<vmem>>, vector<8x8xf32>
      %cst_18 = arith.constant dense<0.000000e+00> : vector<2x8xf32>
      %20 = tpu.matmul %18, %19, %cst_18 {dimension_numbers = #tpu.dot_dimension_numbers<[1], [0], [0], [1], [0, 0, 1, 1], [], []>} : vector<2x8xf32>, vector<8x8xf32>, vector<2x8xf32> -> vector<2x8xf32>
      %c0_19 = arith.constant 0 : index
      %c0_20 = arith.constant 0 : index
      %21 = vector.load %arg6[%c0_19, %c0_20] : memref<1x8xf32, #tpu.memory_space<vmem>>, vector<1x8xf32>
      %22 = vector.broadcast %21 : vector<1x8xf32> to vector<2x8xf32>
      %23 = arith.addf %20, %22 : vector<2x8xf32>
      %cst_21 = arith.constant dense<0xFF800000> : vector<2xf32>
      %24 = vector.multi_reduction <maximumf>, %23, %cst_21 [1] : vector<2x8xf32> to vector<2xf32>
      %25 = vector.shape_cast %24 : vector<2xf32> to vector<2x1xf32>
      %26 = vector.broadcast %25 : vector<2x1xf32> to vector<2x8xf32>
      %27 = arith.subf %23, %26 : vector<2x8xf32>
      %28 = math.exp %27 : vector<2x8xf32>
      %cst_22 = arith.constant dense<0.000000e+00> : vector<2xf32>
      %29 = vector.multi_reduction <add>, %28, %cst_22 [1] : vector<2x8xf32> to vector<2xf32>
      %30 = vector.shape_cast %29 : vector<2xf32> to vector<2x1xf32>
      %31 = vector.broadcast %30 : vector<2x1xf32> to vector<2x8xf32>
      %32 = arith.divf %28, %31 : vector<2x8xf32>
      %c0_23 = arith.constant 0 : index
      %c0_24 = arith.constant 0 : index
      %33 = vector.load %arg7[%c0_23, %c0_24] : memref<2x8xf32, #tpu.memory_space<vmem>>, vector<2x8xf32>
      tpu.vector_store %arg7[%c0_23, %c0_24], %32 {strides = array<i32>} : memref<2x8xf32, #tpu.memory_space<vmem>>, vector<2x8xf32>,
    } else {
    }
    return
  }
  func.func @transform_0(%arg0: i32, %arg1: i32) -> (i32, i32, i32) {
    %c0_i32 = arith.constant 0 : i32
    %c0_i32_0 = arith.constant 0 : i32
    return %arg0, %c0_i32, %arg1 : i32, i32, i32
  }
  func.func @transform_1(%arg0: i32, %arg1: i32) -> (i32, i32) {
    %c0_i32 = arith.constant 0 : i32
    %c0_i32_0 = arith.constant 0 : i32
    %c0_i32_1 = arith.constant 0 : i32
    return %c0_i32, %c0_i32_0 : i32, i32
  }
  func.func @transform_2(%arg0: i32, %arg1: i32) -> (i32, i32) {
    %c0_i32 = arith.constant 0 : i32
    %c0_i32_0 = arith.constant 0 : i32
    %c0_i32_1 = arith.constant 0 : i32
    return %c0_i32, %c0_i32_0 : i32, i32
  }
  func.func @transform_3(%arg0: i32, %arg1: i32) -> (i32, i32) {
    %c0_i32 = arith.constant 0 : i32
    %c0_i32_0 = arith.constant 0 : i32
    %c0_i32_1 = arith.constant 0 : i32
    return %c0_i32, %c0_i32_0 : i32, i32
  }
  func.func @transform_4(%arg0: i32, %arg1: i32) -> (i32, i32) {
    %c0_i32 = arith.constant 0 : i32
    %c0_i32_0 = arith.constant 0 : i32
    %c0_i32_1 = arith.constant 0 : i32
    return %c0_i32, %c0_i32_0 : i32, i32
  }
  func.func @transform_5(%arg0: i32, %arg1: i32) -> (i32, i32) {
    %c0_i32 = arith.constant 0 : i32
    %c0_i32_0 = arith.constant 0 : i32
    return %arg0, %c0_i32 : i32, i32
  }
}

</mosaic_0001>

<llo_original>
// kernel: tpu_custom_call.1
$region0: #{tpu_custom_call.1}
  #allocation0 [shape = 'u32[]', space=smem, size = 0x4, offset = 0x4, fixed_abs, tag = 'smem constant byte address 0x4 - core index']
  #allocation1 [shape = 'u32[144,128]{1,0:T(1,128)}', space=vmem, size = 0x12000, scoped, tag = 'internal scratch']
  #allocation2 [shape = 'f32[2,4]{1,0:T(2,128)}', space=vmem, size = 0x400, scoped, tag = 'scratch operand']
  %s0 = inlined_call_operand.hbm [shape: f32[2,4,256], index: 0, kind: input, shape index: {}]
  %s1 = inlined_call_operand.hbm [shape: f32[4,8], index: 1, kind: input, shape index: {}]
  %s2 = inlined_call_operand.vmem [shape: f32[1,8], index: 2, kind: input, shape index: {}]
  %s3 = inlined_call_operand.vmem [shape: f32[8,8], index: 3, kind: input, shape index: {}]
  %s4 = inlined_call_operand.vmem [shape: f32[1,8], index: 4, kind: input, shape index: {}]
  %s5 = inlined_call_operand.hbm [shape: f32[2,8], index: 5, kind: output, shape index: {}]
  %s6 = sld [smem:[#allocation0]]
  $region69: #{tpu_custom_call.1} parent=0
    _
  %s8 = ssub.s32 1, %s6
  %s9 = scalar_select 0, %s8, %s6
  $region1: #{tpu_custom_call.1} parent=0
    #allocation3 [shape = 'u8[8192]{0}', space=vmem, size = 0x2000, scoped, tag = 'input window, operand 0']
    #allocation4 [shape = 's32[2]{0}', space=sflag, size = 0x8, scoped, tag = 'scoped memory for tpu_custom_call.1']
    #allocation5 [shape = 's32[2]{0}', space=sflag, size = 0x8, scoped, tag = 'scoped memory for tpu_custom_call.1']
    #allocation6 [shape = 'u8[2048]{0}', space=vmem, size = 0x800, scoped, tag = 'input window, operand 1, single buffered']
    #allocation7 [shape = 's32[1]{0}', space=sflag, size = 0x4, scoped, tag = 'scoped memory for tpu_custom_call.1']
    #allocation8 [shape = 'u8[1024]{0}', space=vmem, size = 0x400, scoped, tag = 'output window, operand 0, single buffered']
    %10 = vsyncpa [#allocation4], 0
    %s11 = scalar_lea.sflag [#allocation4], 1
    %12 = vsyncpa %s11, 0
    %13 = vsyncpa [#allocation7], 0
    %14 = vsyncpa [#allocation5], 0
    loop: start=0, step=1, limit=4
    $region2: #{tpu_custom_call.1} parent=1 // loop_pre_header
      _
    $region3: #{tpu_custom_call.1} parent=1 // loop_header
      %s16 = sphi 0, %s20
      %p17 = scmp.ge.s32.totalorder %s16, 4
      %s23 = sphi 0, %s35
      %s24 = sphi 0, %s31
      %s25 = sphi 0, %s23
      %s26 = sphi 0, %s24
      %s27 = sphi 0, %s25
      %s28 = sphi 0, %s26
      %s40 = sphi 0, %s42
      %s43 = sphi 0, %s40
      %s44 = sphi 0, %s43
      %s60 = sphi 0, %s44
      %s64 = sphi 0, %s64
      %s66 = sphi 0, %s64
      %s67 = sphi 0, %s66
      %s81 = sphi 0, %s67
      %s85 = sphi 0, %s85
      %s87 = sphi 0, %s85
      %s88 = sphi 0, %s87
      %s102 = sphi 0, %s88
      %s106 = sphi 0, %s106
      %s108 = sphi 0, %s106
      %s109 = sphi 0, %s108
      %s123 = sphi 0, %s109
      %s127 = sphi 0, %s127
      %s129 = sphi 0, %s127
      %s130 = sphi 0, %s129
      %s144 = sphi 0, %s130
      %s150 = sphi 0, %s152
      %s153 = sphi 0, %s150
      %s154 = sphi 0, %s153
      %s170 = sphi 0, %s154
    $region4: #{tpu_custom_call.1} parent=1 // loop_header_branch
      %19 = sbr.rel (%p17) target = $region8
    $region5: #{tpu_custom_call.1} parent=1 // loop_body
      %s21 = ssub.s32 %s16, 1
      %s22 = ssub.s32 %s16, 2
      %s29 = sadd.s32 1, %s24
      %p30 = scmp.ge.s32.totalorder %s29, 2
      %s31 = scalar_select %p30, 0, %s29
      %s32 = sadd.s32 1, %s23
      %s33 = scalar_select %p30, %s32, %s23
      %p34 = scmp.ge.s32.totalorder %s33, 1
      %s35 = scalar_select %p34, 0, %s33
      %s36 = ssub.s32 %s23, %s35
      %s37 = ssub.s32 %s24, %s31
      %s38 = sor.u32 %s36, %s37
      %p39 = scmp.eq.s32.totalorder %s38, 0
      %s41 = sadd.s32 %s40, 1
      %s42 = scalar_select %p39, %s40, %s41
      %p45 = pneg %p39
      %p46 = scmp.eq.s32.totalorder %s16, 1
      %p47 = por %p45, %p46
      %p48 = scmp.ne.s32.totalorder %s40, %s43
      %p49 = scmp.eq.s32.totalorder %s16, 0
      %p50 = por %p48, %p49
      %p51 = scmp.ne.s32.totalorder %s40, %s43
      %p52 = scmp.eq.s32.totalorder %s21, 1
      %p53 = por %p51, %p52
      %p54 = scmp.ne.s32.totalorder %s43, %s44
      %p55 = scmp.eq.s32.totalorder %s21, 0
      %p56 = por %p54, %p55
      %p57 = scmp.ne.s32.totalorder %s43, %s44
      %p58 = scmp.eq.s32.totalorder %s22, 1
      %p59 = por %p57, %p58
      %p61 = scmp.ne.s32.totalorder %s44, %s60
      %p62 = scmp.eq.s32.totalorder %s22, 0
      %p63 = por %p61, %p62
      %s65 = sadd.s32 %s64, 1
      %p68 = scmp.eq.s32.totalorder %s16, 1
      %p69 = scmp.ne.s32.totalorder %s64, %s66
      %p70 = scmp.eq.s32.totalorder %s16, 0
      %p71 = por %p69, %p70
      %p72 = scmp.ne.s32.totalorder %s64, %s66
      %p73 = scmp.eq.s32.totalorder %s21, 1
      %p74 = por %p72, %p73
      %p75 = scmp.ne.s32.totalorder %s66, %s67
      %p76 = scmp.eq.s32.totalorder %s21, 0
      %p77 = por %p75, %p76
      %p78 = scmp.ne.s32.totalorder %s66, %s67
      %p79 = scmp.eq.s32.totalorder %s22, 1
      %p80 = por %p78, %p79
      %p82 = scmp.ne.s32.totalorder %s67, %s81
      %p83 = scmp.eq.s32.totalorder %s22, 0
      %p84 = por %p82, %p83
      %s86 = sadd.s32 %s85, 1
      %p89 = scmp.eq.s32.totalorder %s16, 1
      %p90 = scmp.ne.s32.totalorder %s85, %s87
      %p91 = scmp.eq.s32.totalorder %s16, 0
      %p92 = por %p90, %p91
      %p93 = scmp.ne.s32.totalorder %s85, %s87
      %p94 = scmp.eq.s32.totalorder %s21, 1
      %p95 = por %p93, %p94
      %p96 = scmp.ne.s32.totalorder %s87, %s88
      %p97 = scmp.eq.s32.totalorder %s21, 0
      %p98 = por %p96, %p97
      %p99 = scmp.ne.s32.totalorder %s87, %s88
      %p100 = scmp.eq.s32.totalorder %s22, 1
      %p101 = por %p99, %p100
      %p103 = scmp.ne.s32.totalorder %s88, %s102
      %p104 = scmp.eq.s32.totalorder %s22, 0
      %p105 = por %p103, %p104
      %s107 = sadd.s32 %s106, 1
      %p110 = scmp.eq.s32.totalorder %s16, 1
      %p111 = scmp.ne.s32.totalorder %s106, %s108
      %p112 = scmp.eq.s32.totalorder %s16, 0
      %p113 = por %p111, %p112
      %p114 = scmp.ne.s32.totalorder %s106, %s108
      %p115 = scmp.eq.s32.totalorder %s21, 1
      %p116 = por %p114, %p115
      %p117 = scmp.ne.s32.totalorder %s108, %s109
      %p118 = scmp.eq.s32.totalorder %s21, 0
      %p119 = por %p117, %p118
      %p120 = scmp.ne.s32.totalorder %s108, %s109
      %p121 = scmp.eq.s32.totalorder %s22, 1
      %p122 = por %p120, %p121
      %p124 = scmp.ne.s32.totalorder %s109, %s123
      %p125 = scmp.eq.s32.totalorder %s22, 0
      %p126 = por %p124, %p125
      %s128 = sadd.s32 %s127, 1
      %p131 = scmp.eq.s32.totalorder %s16, 1
      %p132 = scmp.ne.s32.totalorder %s127, %s129
      %p133 = scmp.eq.s32.totalorder %s16, 0
      %p134 = por %p132, %p133
      %p135 = scmp.ne.s32.totalorder %s127, %s129
      %p136 = scmp.eq.s32.totalorder %s21, 1
      %p137 = por %p135, %p136
      %p138 = scmp.ne.s32.totalorder %s129, %s130
      %p139 = scmp.eq.s32.totalorder %s21, 0
      %p140 = por %p138, %p139
      %p141 = scmp.ne.s32.totalorder %s129, %s130
      %p142 = scmp.eq.s32.totalorder %s22, 1
      %p143 = por %p141, %p142
      %p145 = scmp.ne.s32.totalorder %s130, %s144
      %p146 = scmp.eq.s32.totalorder %s22, 0
      %p147 = por %p145, %p146
      %s148 = ssub.s32 %s23, %s35
      %p149 = scmp.eq.s32.totalorder %s148, 0
      %s151 = sadd.s32 %s150, 1
      %s152 = scalar_select %p149, %s150, %s151
      %p155 = pneg %p149
      %p156 = scmp.eq.s32.totalorder %s16, 1
      %p157 = por %p155, %p156
      %p158 = scmp.ne.s32.totalorder %s150, %s153
      %p159 = scmp.eq.s32.totalorder %s16, 0
      %p160 = por %p158, %p159
      %p161 = scmp.ne.s32.totalorder %s150, %s153
      %p162 = scmp.eq.s32.totalorder %s21, 1
      %p163 = por %p161, %p162
      %p164 = scmp.ne.s32.totalorder %s153, %s154
      %p165 = scmp.eq.s32.totalorder %s21, 0
      %p166 = por %p164, %p165
      %p167 = scmp.ne.s32.totalorder %s153, %s154
      %p168 = scmp.eq.s32.totalorder %s22, 1
      %p169 = por %p167, %p168
      %p171 = scmp.ne.s32.totalorder %s154, %s170
      %p172 = scmp.eq.s32.totalorder %s22, 0
      %p173 = por %p171, %p172
      %p174 = scmp.le.s32.totalorder 1, %s16
      %p175 = scmp.lt.s32.totalorder %s16, 3
      %p176 = pnand %p174, %p175
      %p177 = pneg %p176
      // Predicated region
      $region9: #{tpu_custom_call.1} parent=5 // pred_check
        _
      $region10: #{tpu_custom_call.1} parent=5 // pred_check_branch
        %179 = sbr.rel (%p176) target = $region12
      $region11: #{tpu_custom_call.1} parent=5 // pred_region
        %s180 = ssub.s32 %s16, 1
        // Predicated region
        $region13: #{tpu_custom_call.1} parent=11 // pred_check
          %p181 = pneg %p77
        $region14: #{tpu_custom_call.1} parent=11 // pred_check_branch
          %183 = sbr.rel (%p181) target = $region16
        $region15: #{tpu_custom_call.1} parent=11 // pred_region
          %s185 = ssub.s32 64, 64
          %186 = vsyncadd [#allocation7], %s185
          %s188 = sshll.u32 [#allocation6], 4
          %s189 = int_to_ptr.vmem [resolvable:$true] %s188
          %191 = dma.hbm_to_vmem [thread:$0]  %s1, 64, %s189, [#allocation7]
        $region16: #{tpu_custom_call.1} parent=11 // pred_fallthru
          _
        // Predicated region
        $region17: #{tpu_custom_call.1} parent=11 // pred_check
          %p192 = pneg %p98
        $region18: #{tpu_custom_call.1} parent=11 // pred_check_branch
          %194 = sbr.rel (%p192) target = $region20
        $region19: #{tpu_custom_call.1} parent=11 // pred_region
          _
        $region20: #{tpu_custom_call.1} parent=11 // pred_fallthru
          _
        // Predicated region
        $region21: #{tpu_custom_call.1} parent=11 // pred_check
          %p195 = pneg %p119
        $region22: #{tpu_custom_call.1} parent=11 // pred_check_branch
          %197 = sbr.rel (%p195) target = $region24
        $region23: #{tpu_custom_call.1} parent=11 // pred_region
          _
        $region24: #{tpu_custom_call.1} parent=11 // pred_fallthru
          _
        // Predicated region
        $region25: #{tpu_custom_call.1} parent=11 // pred_check
          %p198 = pneg %p140
        $region26: #{tpu_custom_call.1} parent=11 // pred_check_branch
          %200 = sbr.rel (%p198) target = $region28
        $region27: #{tpu_custom_call.1} parent=11 // pred_region
          _
        $region28: #{tpu_custom_call.1} parent=11 // pred_fallthru
          _
      $region12: #{tpu_custom_call.1} parent=5 // pred_fallthru
        _
      %p201 = scmp.lt.s32.totalorder %s16, 2
      // Predicated region
      $region29: #{tpu_custom_call.1} parent=5 // pred_check
        %p202 = pneg %p201
      $region30: #{tpu_custom_call.1} parent=5 // pred_check_branch
        %204 = sbr.rel (%p202) target = $region32
      $region31: #{tpu_custom_call.1} parent=5 // pred_region
        // Predicated region
        $region33: #{tpu_custom_call.1} parent=31 // pred_check
          %p205 = pneg %p50
        $region34: #{tpu_custom_call.1} parent=31 // pred_check_branch
          %207 = sbr.rel (%p205) target = $region36
        $region35: #{tpu_custom_call.1} parent=31 // pred_region
          %s208 = sand.u32 %s40, 1
          %s209 = scalar_lea.sflag [#allocation4], %s208
          %s210 = sand.u32 %s40, 1
          %s211 = smul.addr %s210, 8
          %s212 = scalar_lea.vmem [#allocation3], %s211
          %s213 = smul.u32 2, %s23
          %s215 = ssub.s32 128, 128
          %216 = vsyncadd %s209, %s215
          %s217 = smul.addr %s213, 2
          %s218 = sadd.s32 %s24, %s217
          %s219 = smul.addr %s218, 64
          %s220 = scalar_lea.hbm %s0, %s219
          %s221 = sshll.u32 %s212, 4
          %s222 = int_to_ptr.vmem [resolvable:$true] %s221
          %227 = dma.hbm_to_vmem [thread:$0]  %s220, 128, %s222, %s209, 128, 64, 4
        $region36: #{tpu_custom_call.1} parent=31 // pred_fallthru
          _
      $region32: #{tpu_custom_call.1} parent=5 // pred_fallthru
        _
      %p228 = scmp.le.s32.totalorder 1, %s16
      %p229 = scmp.lt.s32.totalorder %s16, 3
      %p230 = pnand %p228, %p229
      %p231 = pneg %p230
      // Predicated region
      $region37: #{tpu_custom_call.1} parent=5 // pred_check
        _
      $region38: #{tpu_custom_call.1} parent=5 // pred_check_branch
        %233 = sbr.rel (%p230) target = $region40
      $region39: #{tpu_custom_call.1} parent=5 // pred_region
        %s234 = ssub.s32 %s16, 1
        %s235 = sand.u32 %s43, 1
        %s236 = scalar_lea.sflag [#allocation4], %s235
        %s237 = sand.u32 %s43, 1
        %s238 = smul.addr %s237, 8
        %s239 = scalar_lea.vmem [#allocation3], %s238
        // Predicated region
        $region41: #{tpu_custom_call.1} parent=39 // pred_check
          %p240 = pneg %p56
        $region42: #{tpu_custom_call.1} parent=39 // pred_check_branch
          %242 = sbr.rel (%p240) target = $region44
        $region43: #{tpu_custom_call.1} parent=39 // pred_region
          %243 = dma.done %s236, 128
        $region44: #{tpu_custom_call.1} parent=39 // pred_fallthru
          _
        // Predicated region
        $region45: #{tpu_custom_call.1} parent=39 // pred_check
          %p244 = pneg %p77
        $region46: #{tpu_custom_call.1} parent=39 // pred_check_branch
          %246 = sbr.rel (%p244) target = $region48
        $region47: #{tpu_custom_call.1} parent=39 // pred_region
          %247 = dma.done [#allocation7], 64
        $region48: #{tpu_custom_call.1} parent=39 // pred_fallthru
          _
        %s248 = sand.u32 %s43, 1
        %s249 = scalar_lea.sflag [#allocation4], %s248
        %s250 = sand.u32 %s43, 1
        %s251 = smul.addr %s250, 8
        %s252 = scalar_lea.vmem [#allocation3], %s251
        %p253 = pneg %p56
        %p254 = pneg %p53
        %p255 = pneg %p77
        %p256 = pneg %p74
        %p257 = pneg %p98
        %p258 = pneg %p95
        %p259 = pneg %p119
        %p260 = pneg %p116
        %p261 = pneg %p140
        %p262 = pneg %p137
        %p263 = pneg %p166
        %p264 = pneg %p163
        %s265 = smul.u32 2, %s25
        %p266 = scmp.eq.s32.totalorder %s26, 0
        // Predicated region
        $region49: #{tpu_custom_call.1} parent=39 // pred_check
          %p267 = pneg %p266
        $region50: #{tpu_custom_call.1} parent=39 // pred_check_branch
          %269 = sbr.rel (%p267) target = $region52
        $region51: #{tpu_custom_call.1} parent=39 // pred_region
          %vm270 = vcmask 25600
          %271 = vst.msk [vmem:[#allocation2] sm:$0x3] %vm270, 0.0
        $region52: #{tpu_custom_call.1} parent=39 // pred_fallthru
          _
        %v272 = vld [vmem:[#allocation2] sm:$0x3]
        %v273 = vld [vmem:[%s239] sm:$0xf]
        %v274 = vld [vmem:[%s239 + $0x4] sm:$0xf]
        %vm275 = vcmask 1043456
        %v276 = vsel %vm275, %v273, 0.0
        %277 = vadd.xlane.f32.xlu0 %v276
        %v278 = vpop.xlane.xlu0 %277
        %v279 = vsel %vm275, %v274, 0.0
        %280 = vadd.xlane.f32.xlu0 %v279
        %v281 = vpop.xlane.xlu0 %280
        %v284 = vlaneseq
        %v285 = vand.u32 %v284, 127
        %v286 = vlaneseq
        %v287 = vshrl.u32 %v286, 7
        %v288 = vsub.s32 %v285, %v287
        %v289 = vrot.slane %v278, %v288
        %v290 = vlaneseq
        %v291 = vshrl.u32 %v290, 7
        %v292 = vsub.s32 %v285, %v291
        %v293 = vrot.slane %v281, %v292
        %vm294 = vcmask 1041409
        %v295 = vsel %vm294, %v293, %v289
        %v297 = vadd.f32 %v272, %v295
        %vm298 = vcmask 25600
        %299 = vst.msk [vmem:[#allocation2] sm:$0x3] %vm298, %v297
        %p300 = scmp.eq.s32.totalorder %s26, 1
        // Predicated region
        $region53: #{tpu_custom_call.1} parent=39 // pred_check
          %p301 = pneg %p300
        $region54: #{tpu_custom_call.1} parent=39 // pred_check_branch
          %303 = sbr.rel (%p301) target = $region56
        $region55: #{tpu_custom_call.1} parent=39 // pred_region
          %v304 = vld [vmem:[#allocation2] sm:$0x3]
          %v305 = vld [vmem:[#allocation6] sm:$0xf]
          %v306 = vld [vmem:[%s2] sm:$0x1]
          %v308 = vlaneseq
          %v309 = vshrl.u32 %v308, 7
          %v310 = vsub.s32 0, %v309
          %v311 = vrot.slane %v306, %v310
          %vm313 = vcmask 31744
          %v315 = vsel %vm313, %v304, 0
          %v318 = vsel %vm275, %v305, 0
          %320 = vmatprep.subr.mxu0 0.0
          %321 = vmatpush1.msra.mxu0 %v318
          %322 = vmatprep.subr.mxu0 0.0
          %323 = vmatpush1.msra.mxu0 0.0
          %324 = vmatprep.subr.mxu0 0.0
          %325 = vmatpush1.msra.mxu0 0.0
          %326 = vmatprep.subr.mxu0 0.0
          %327 = vmatpush1.msra.mxu0 0.0
          %328 = vmatprep.subr.mxu0 0.0
          %329 = vmatpush1.msra.mxu0 0.0
          %330 = vmatprep.subr.mxu0 0.0
          %331 = vmatpush1.msra.mxu0 0.0
          %332 = vmatprep.subr.mxu0 0.0
          %333 = vmatpush1.msra.mxu0 0.0
          %334 = vmatprep.subr.mxu0 0.0
          %335 = vmatpush1.msra.mxu0 0.0
          %336 = vmatprep.subr.mxu0 0.0
          %337 = vmatpush1.msra.mxu0 0.0
          %338 = vmatprep.subr.mxu0 0.0
          %339 = vmatpush1.msra.mxu0 0.0
          %340 = vmatprep.subr.mxu0 0.0
          %341 = vmatpush1.msra.mxu0 0.0
          %342 = vmatprep.subr.mxu0 0.0
          %343 = vmatpush1.msra.mxu0 0.0
          %344 = vmatprep.subr.mxu0 0.0
          %345 = vmatpush1.msra.mxu0 0.0
          %346 = vmatprep.subr.mxu0 0.0
          %347 = vmatpush1.msra.mxu0 0.0
          %348 = vmatprep.subr.mxu0 0.0
          %349 = vmatpush1.msra.mxu0 0.0
          %350 = vmatprep.subr.mxu0 0.0
          %351 = vmatpush1.msra.mxu0 0.0
          %352 = vmatprep.subr.mxu0 0.0
          %353 = vmatpush1.msra.mxu0 0.0
          %354 = vmatprep.subr.mxu0 0.0
          %355 = vmatpush1.msra.mxu0 0.0
          %356 = vmatprep.subr.mxu0 0.0
          %357 = vmatpush1.msra.mxu0 0.0
          %358 = vmatprep.subr.mxu0 0.0
          %359 = vmatpush1.msra.mxu0 0.0
          %360 = vmatprep.subr.mxu0 0.0
          %361 = vmatpush1.msra.mxu0 0.0
          %362 = vmatprep.subr.mxu0 0.0
          %363 = vmatpush1.msra.mxu0 0.0
          %364 = vmatprep.subr.mxu0 0.0
          %365 = vmatpush1.msra.mxu0 0.0
          %366 = vmatprep.subr.mxu0 0.0
          %367 = vmatpush1.msra.mxu0 0.0
          %368 = vmatprep.subr.mxu0 0.0
          %369 = vmatpush1.msra.mxu0 0.0
          %370 = vmatprep.subr.mxu0 0.0
          %371 = vmatpush1.msra.mxu0 0.0
          %372 = vmatprep.subr.mxu0 0.0
          %373 = vmatpush1.msra.mxu0 0.0
          %374 = vmatprep.subr.mxu0 0.0
          %375 = vmatpush1.msra.mxu0 0.0
          %376 = vmatprep.subr.mxu0 0.0
          %377 = vmatpush1.msra.mxu0 0.0
          %378 = vmatprep.subr.mxu0 0.0
          %379 = vmatpush1.msra.mxu0 0.0
          %380 = vmatprep.subr.mxu0 0.0
          %381 = vmatpush1.msra.mxu0 0.0
          %382 = vmatprep.subr.mxu0 0.0
          %383 = vmatpush1.msra.mxu0 0.0
          %384 = vmatprep.mubr.f32.mxu0 0.0
          %385 = vmatmul.mubr.f32.gmra.mrb[0].mxu0 %v315
          %v386 = vpop.f32.mrb[0].mxu0
          %v387 = vadd.f32 %v311, %v386
          %v388 = vpop.f32.mrb[0].mxu0
          %389 = vdwg.mxu0
          %v390 = vmax.f32 %v387, 0.0
          %v391 = vld [vmem:[%s3] sm:$0xff]
          %v392 = vld [vmem:[%s4] sm:$0x1]
          %v394 = vlaneseq
          %v395 = vshrl.u32 %v394, 7
          %v396 = vsub.s32 0, %v395
          %v397 = vrot.slane %v392, %v396
          %vm399 = vcmask 64512
          %v401 = vsel %vm399, %v390, 0
          %403 = vmatprep.subr.mxu0 0.0
          %404 = vmatpush1.msra.mxu0 %v391
          %405 = vmatprep.subr.mxu0 0.0
          %406 = vmatpush1.msra.mxu0 0.0
          %407 = vmatprep.subr.mxu0 0.0
          %408 = vmatpush1.msra.mxu0 0.0
          %409 = vmatprep.subr.mxu0 0.0
          %410 = vmatpush1.msra.mxu0 0.0
          %411 = vmatprep.subr.mxu0 0.0
          %412 = vmatpush1.msra.mxu0 0.0
          %413 = vmatprep.subr.mxu0 0.0
          %414 = vmatpush1.msra.mxu0 0.0
          %415 = vmatprep.subr.mxu0 0.0
          %416 = vmatpush1.msra.mxu0 0.0
          %417 = vmatprep.subr.mxu0 0.0
          %418 = vmatpush1.msra.mxu0 0.0
          %419 = vmatprep.subr.mxu0 0.0
          %420 = vmatpush1.msra.mxu0 0.0
          %421 = vmatprep.subr.mxu0 0.0
          %422 = vmatpush1.msra.mxu0 0.0
          %423 = vmatprep.subr.mxu0 0.0
          %424 = vmatpush1.msra.mxu0 0.0
          %425 = vmatprep.subr.mxu0 0.0
          %426 = vmatpush1.msra.mxu0 0.0
          %427 = vmatprep.subr.mxu0 0.0
          %428 = vmatpush1.msra.mxu0 0.0
          %429 = vmatprep.subr.mxu0 0.0
          %430 = vmatpush1.msra.mxu0 0.0
          %431 = vmatprep.subr.mxu0 0.0
          %432 = vmatpush1.msra.mxu0 0.0
          %433 = vmatprep.subr.mxu0 0.0
          %434 = vmatpush1.msra.mxu0 0.0
          %435 = vmatprep.subr.mxu0 0.0
          %436 = vmatpush1.msra.mxu0 0.0
          %437 = vmatprep.subr.mxu0 0.0
          %438 = vmatpush1.msra.mxu0 0.0
          %439 = vmatprep.subr.mxu0 0.0
          %440 = vmatpush1.msra.mxu0 0.0
          %441 = vmatprep.subr.mxu0 0.0
          %442 = vmatpush1.msra.mxu0 0.0
          %443 = vmatprep.subr.mxu0 0.0
          %444 = vmatpush1.msra.mxu0 0.0
          %445 = vmatprep.subr.mxu0 0.0
          %446 = vmatpush1.msra.mxu0 0.0
          %447 = vmatprep.subr.mxu0 0.0
          %448 = vmatpush1.msra.mxu0 0.0
          %449 = vmatprep.subr.mxu0 0.0
          %450 = vmatpush1.msra.mxu0 0.0
          %451 = vmatprep.subr.mxu0 0.0
          %452 = vmatpush1.msra.mxu0 0.0
          %453 = vmatprep.subr.mxu0 0.0
          %454 = vmatpush1.msra.mxu0 0.0
          %455 = vmatprep.subr.mxu0 0.0
          %456 = vmatpush1.msra.mxu0 0.0
          %457 = vmatprep.subr.mxu0 0.0
          %458 = vmatpush1.msra.mxu0 0.0
          %459 = vmatprep.subr.mxu0 0.0
          %460 = vmatpush1.msra.mxu0 0.0
          %461 = vmatprep.subr.mxu0 0.0
          %462 = vmatpush1.msra.mxu0 0.0
          %463 = vmatprep.subr.mxu0 0.0
          %464 = vmatpush1.msra.mxu0 0.0
          %465 = vmatprep.subr.mxu0 0.0
          %466 = vmatpush1.msra.mxu0 0.0
          %467 = vmatprep.mubr.f32.mxu0 0.0
          %468 = vmatmul.mubr.f32.gmra.mrb[0].mxu0 %v401
          %v469 = vpop.f32.mrb[0].mxu0
          %v470 = vadd.f32 %v397, %v469
          %v471 = vpop.f32.mrb[0].mxu0
          %472 = vdwg.mxu0
          %vm473 = vcmask 58368
          %v474 = vsel %vm473, %v470, -inf
          %475 = vmax.xlane.f32.xlu0 %v474
          %v476 = vpop.xlane.xlu0 %475
          %v477 = vsub.f32 %v470, %v476
          %v478 = vmul.f32 %v477, 1.442695
          %v479 = vpow.pop %v478
          %v480 = vsel %vm473, %v479, 0.0
          %481 = vadd.xlane.f32.xlu0 %v480
          %v482 = vpop.xlane.xlu0 %481
          %v483 = vrcp.pop %v482
          %v484 = vmul.f32 %v479, %v483
          %485 = vst.msk [vmem:[#allocation8] sm:$0x3] %vm473, %v484
        $region56: #{tpu_custom_call.1} parent=39 // pred_fallthru
          _
        // Predicated region
        $region57: #{tpu_custom_call.1} parent=39 // pred_check
          %p486 = pneg %p163
        $region58: #{tpu_custom_call.1} parent=39 // pred_check_branch
          %488 = sbr.rel (%p486) target = $region60
        $region59: #{tpu_custom_call.1} parent=39 // pred_region
          %s490 = ssub.s32 32, 32
          %491 = vsyncadd [#allocation5], %s490
          %s492 = smul.addr %s25, 32
          %s493 = scalar_lea.hbm %s5, %s492
          %s495 = sshll.u32 [#allocation8], 4
          %s496 = int_to_ptr.vmem [resolvable:$true] %s495
          %498 = dma.vmem_to_hbm [thread:$0]  %s496, 32, %s493, [#allocation5]
        $region60: #{tpu_custom_call.1} parent=39 // pred_fallthru
          _
        // Predicated region
        $region61: #{tpu_custom_call.1} parent=39 // pred_check
          %p499 = pneg %p163
        $region62: #{tpu_custom_call.1} parent=39 // pred_check_branch
          %501 = sbr.rel (%p499) target = $region64
        $region63: #{tpu_custom_call.1} parent=39 // pred_region
          %502 = dma.done [#allocation5], 32
        $region64: #{tpu_custom_call.1} parent=39 // pred_fallthru
          _
      $region40: #{tpu_custom_call.1} parent=5 // pred_fallthru
        _
      %p503 = scmp.le.s32.totalorder 2, %s16
      // Predicated region
      $region65: #{tpu_custom_call.1} parent=5 // pred_check
        %p504 = pneg %p503
      $region66: #{tpu_custom_call.1} parent=5 // pred_check_branch
        %506 = sbr.rel (%p504) target = $region68
      $region67: #{tpu_custom_call.1} parent=5 // pred_region
        %s507 = ssub.s32 %s16, 2
      $region68: #{tpu_custom_call.1} parent=5 // pred_fallthru
        _
    $region6: #{tpu_custom_call.1} parent=1 // loop_footer
      %s20 = sadd.s32 1, %s16
    $region7: #{tpu_custom_call.1} parent=1 // loop_footer_branch
      %15 = sbr.rel target = $region3
    $region8: #{tpu_custom_call.1} parent=1 // loop_exit
      _
    %508 = vsyncpa [#allocation4], 1
    %s509 = scalar_lea.sflag [#allocation4], 1
    %510 = vsyncpa %s509, 1
    %511 = vsyncpa [#allocation7], 1
    %512 = vsyncpa [#allocation5], 1
    %s513 = scalar_lea.sflag [#allocation5], 1
    %514 = vsyncpa %s513, 1

</llo_original>
